<compile_context>
chip_gen: v5e
topology: v5e:2x2
jax: 0.10.0
libtpu: 0.0.40
codegen_flags: <defaults>
</compile_context>

<pallas_src>
import functools

import jax
import jax.numpy as jnp
from jax.experimental import pallas as pl
from jax.experimental.pallas import tpu as pltpu


# Explicit scoped-VMEM cap: well above the default 16/32 MiB limits, with
# headroom under v7x's 64 MiB physical VMEM (v5e/v6e have 128 MiB).
_VMEM_LIMIT = 48 * 1024 * 1024


# --------------------------------------------------------------------------
# Tiling helper
# --------------------------------------------------------------------------

def _pick_tile(dim, cap, align):
    """Largest multiple of `align` that is <= cap and divides `dim`.
    If dim <= cap, the whole dim is used (full-extent blocks are always legal)."""
    if dim <= cap:
        return dim
    t = cap - (cap % align)
    while t >= align:
        if dim % t == 0:
            return t
        t -= align
    return dim


# --------------------------------------------------------------------------
# Pallas kernels
# --------------------------------------------------------------------------

def _linear_kernel(x_ref, w_ref, b_ref, o_ref, *, activation):
    acc = jnp.dot(x_ref[...], w_ref[...], preferred_element_type=jnp.float32)
    acc = acc + b_ref[...]
    if activation == "gelu":
        # TODO(synk): tanh-approx GELU ("gelu_new"); HF bert-base uses erf GELU
        # (numeric delta ~1e-3, acceptable for this port).
        acc = 0.5 * acc * (1.0 + jnp.tanh(
            0.7978845608028654 * (acc + 0.044715 * acc * acc * acc)))
    o_ref[...] = acc.astype(o_ref.dtype)


def linear(x, w, b, activation=None, out_dtype=jnp.bfloat16):
    """y = act(x @ w + b).  x:(M,K) bf16, w:(K,N) bf16, b:(N,) f32.

    Full-N output tiles (BERT-base weights are <= 4.5 MiB bf16, far under any
    generation's VMEM): each weight is DMA'd once, and the activation stream
    is read from HBM exactly once.  Rows use 16-aligned bf16 sublane tiles."""
    M, K = x.shape
    N = w.shape[1]
    tn = _pick_tile(N, 3072, 128)    # full output width for all BERT-base mats
    tm = _pick_tile(M, 512, 16)      # bf16 packs (16,128) per vreg
    kernel = functools.partial(_linear_kernel, activation=activation)
    cost = pl.CostEstimate(
        flops=2 * M * K * N,
        transcendentals=(M * N) if activation == "gelu" else 0,
        bytes_accessed=2 * (M * K + K * N + M * N) + 4 * N)
    return pl.pallas_call(
        kernel,
        out_shape=jax.ShapeDtypeStruct((M, N), out_dtype),
        # N-tiles on the slow axis (extent 1 for BERT-base) -> weight tile stays
        # resident while the fast M axis streams activation rows.
        grid=(N // tn, M // tm),
        in_specs=[pl.BlockSpec((tm, K), lambda j, i: (i, 0)),
                  pl.BlockSpec((K, tn), lambda j, i: (0, j)),
                  pl.BlockSpec((1, tn), lambda j, i: (0, j))],
        out_specs=pl.BlockSpec((tm, tn), lambda j, i: (i, j)),
        compiler_params=pltpu.CompilerParams(
            dimension_semantics=("parallel", "parallel"),
            vmem_limit_bytes=_VMEM_LIMIT),
        cost_estimate=cost,
    )(x, w, b.reshape(1, N).astype(jnp.float32))


def _linear_ln_kernel(x_ref, w_ref, b_ref, r_ref, g_ref, bb_ref, o_ref, *, eps):
    acc = jnp.dot(x_ref[...], w_ref[...], preferred_element_type=jnp.float32)
    acc = acc + b_ref[...] + r_ref[...].astype(jnp.float32)      # bias + residual
    mu = jnp.mean(acc, axis=-1, keepdims=True)
    var = jnp.mean(jnp.square(acc - mu), axis=-1, keepdims=True)
    y = (acc - mu) * jax.lax.rsqrt(var + eps) * g_ref[...] + bb_ref[...]
    o_ref[...] = y.astype(o_ref.dtype)


def linear_residual_layernorm(x, w, b, residual, g, beta, eps=1e-12,
                              out_dtype=jnp.bfloat16):
    """LayerNorm((x @ w + b) + residual), with the residual add + LN fused into
    the matmul epilogue.  Requires the full output width per block (tn == N),
    which holds for the attention-out and FFN-down projections (N == H == 768).
    Removes two full read+write HBM passes over the activations per layer."""
    M, K = x.shape
    N = w.shape[1]
    tm = _pick_tile(M, 512, 16)
    kernel = functools.partial(_linear_ln_kernel, eps=eps)
    cost = pl.CostEstimate(
        flops=2 * M * K * N + 8 * M * N,
        transcendentals=M,
        bytes_accessed=2 * (M * K + K * N + 2 * M * N) + 12 * N)
    row_full = pl.BlockSpec((tm, N), lambda i: (i, 0))
    vec_full = pl.BlockSpec((1, N), lambda i: (0, 0))
    return pl.pallas_call(
        kernel,
        out_shape=jax.ShapeDtypeStruct((M, N), out_dtype),
        grid=(M // tm,),
        in_specs=[pl.BlockSpec((tm, K), lambda i: (i, 0)),   # activations
                  pl.BlockSpec((K, N), lambda i: (0, 0)),    # resident weight
                  vec_full,                                  # bias
                  row_full,                                  # residual stream
                  vec_full,                                  # gamma
                  vec_full],                                 # beta
        out_specs=row_full,
        compiler_params=pltpu.CompilerParams(
            dimension_semantics=("parallel",),
            vmem_limit_bytes=_VMEM_LIMIT),
        cost_estimate=cost,
    )(x, w, b.reshape(1, N).astype(jnp.float32), residual,
      g.reshape(1, N).astype(jnp.float32), beta.reshape(1, N).astype(jnp.float32))


def _layernorm_kernel(x_ref, g_ref, b_ref, o_ref, *, eps):
    x = x_ref[...].astype(jnp.float32)
    mu = jnp.mean(x, axis=-1, keepdims=True)
    var = jnp.mean(jnp.square(x - mu), axis=-1, keepdims=True)
    y = (x - mu) * jax.lax.rsqrt(var + eps) * g_ref[...] + b_ref[...]
    o_ref[...] = y.astype(o_ref.dtype)


def layernorm(x, g, b, eps=1e-12, out_dtype=jnp.bfloat16):
    """Standalone LayerNorm over the last dim (used only for the embeddings)."""
    M, H = x.shape
    tm = _pick_tile(M, 512, 16)
    kernel = functools.partial(_layernorm_kernel, eps=eps)
    row_spec = pl.BlockSpec((tm, H), lambda i: (i, 0))
    vec_spec = pl.BlockSpec((1, H), lambda i: (0, 0))
    return pl.pallas_call(
        kernel,
        out_shape=jax.ShapeDtypeStruct((M, H), out_dtype),
        grid=(M // tm,),
        in_specs=[row_spec, vec_spec, vec_spec],
        out_specs=row_spec,
        compiler_params=pltpu.CompilerParams(dimension_semantics=("parallel",)),
    )(x, g.reshape(1, H).astype(jnp.float32), b.reshape(1, H).astype(jnp.float32))


def _attention_kernel(q_ref, k_ref, v_ref, m_ref, o_ref, *, scale, dh, hpb):
    mask = m_ref[0]                      # (1, S) additive key mask (f32)
    qb = q_ref[...]                      # (S, hpb*dh) bf16
    kb = k_ref[...]
    vb = v_ref[...]
    outs = []
    for h in range(hpb):                 # unrolled over the packed heads
        q = qb[:, h * dh:(h + 1) * dh]
        k = kb[:, h * dh:(h + 1) * dh]
        v = vb[:, h * dh:(h + 1) * dh]
        s = jnp.dot(q, k.T, preferred_element_type=jnp.float32) * scale   # (S, S)
        s = s + mask
        s = s - jnp.max(s, axis=-1, keepdims=True)
        p = jnp.exp(s)
        p = p / jnp.sum(p, axis=-1, keepdims=True)   # exact divide for parity
        outs.append(jnp.dot(p.astype(v.dtype), v, preferred_element_type=jnp.float32))
    # concat per-head (S, dh) results -> lane-dense (S, hpb*dh) store
    o_ref[...] = jnp.concatenate(outs, axis=-1).astype(o_ref.dtype)


def attention(qkv, add_mask, B, S, nH, Dh, out_dtype=jnp.bfloat16, heads_per_block=4):
    """Self-attention reading Q/K/V directly from the fused (B*S, 3H) matrix.

    qkv:      (B*S, 3H) bf16 (columns: [Q | K | V], heads contiguous inside each)
    add_mask: (B, 1, S)  f32 additive mask (0 real, -10000 pad)
    returns   (B*S, H) bf16 context, heads already merged (no transposes needed).
    """
    H = nH * Dh
    hpb = min(heads_per_block, nH)
    while hpb > 1 and (nH % hpb != 0 or (hpb * Dh) % 128 != 0):
        hpb -= 1
    if (hpb * Dh) % 128 != 0:
        hpb = nH                          # full-width fallback (always legal)
    cols = hpb * Dh                       # 256-lane-dense head-group block
    ncb = H // cols                       # column blocks per Q/K/V
    kernel = functools.partial(_attention_kernel,
                               scale=1.0 / (Dh ** 0.5), dh=Dh, hpb=hpb)
    cost = pl.CostEstimate(
        flops=4 * B * nH * S * S * Dh,
        transcendentals=B * nH * S * S,
        bytes_accessed=2 * (4 * B * S * H) + 4 * B * S * ncb)
    return pl.pallas_call(
        kernel,
        out_shape=jax.ShapeDtypeStruct((B * S, H), out_dtype),
        grid=(B, ncb),
        in_specs=[
            pl.BlockSpec((S, cols), lambda b, g: (b, g)),            # Q columns
            pl.BlockSpec((S, cols), lambda b, g: (b, g + ncb)),      # K columns
            pl.BlockSpec((S, cols), lambda b, g: (b, g + 2 * ncb)),  # V columns
            pl.BlockSpec((1, 1, S), lambda b, g: (b, 0, 0)),         # key mask
        ],
        out_specs=pl.BlockSpec((S, cols), lambda b, g: (b, g)),
        compiler_params=pltpu.CompilerParams(
            dimension_semantics=("parallel", "parallel"),
            vmem_limit_bytes=_VMEM_LIMIT),
        cost_estimate=cost,
    )(qkv, qkv, qkv, add_mask)


# --------------------------------------------------------------------------
# Parameter init (deterministic, synthetic — stands in for pretrained BERT)
# --------------------------------------------------------------------------

def init_params(key, cfg):
    H, I, L = cfg["hidden"], cfg["intermediate"], cfg["layers"]
    std = 0.02

    def nrm(k, shape, dtype=jnp.float32):
        return (std * jax.random.normal(k, shape, jnp.float32)).astype(dtype)

    keys = jax.random.split(key, 6 + L)
    params = {
        "word_emb": nrm(keys[0], (cfg["vocab"], H)),
        "pos_emb": nrm(keys[1], (cfg["max_pos"], H)),
        "type_emb": nrm(keys[2], (cfg["type_vocab"], H)),
        "emb_ln_g": jnp.ones((H,), jnp.float32),
        "emb_ln_b": jnp.zeros((H,), jnp.float32),
        "pool_w": nrm(keys[3], (H, H)),                       # pooler (plain JAX)
        "pool_b": jnp.zeros((H,), jnp.float32),
        "out_w": nrm(keys[4], (H, cfg["num_output"])),        # nn.Linear(768, num_output)
        "out_b": jnp.zeros((cfg["num_output"],), jnp.float32),
        "layers": [],
    }
    for l in range(L):
        lk = jax.random.split(keys[6 + l], 4)
        params["layers"].append({
            # fused QKV weight: [Wq | Wk | Wv] along the output dim
            "wqkv": nrm(lk[0], (H, 3 * H), jnp.bfloat16),
            "bqkv": jnp.zeros((3 * H,), jnp.float32),
            "wo": nrm(lk[1], (H, H), jnp.bfloat16),
            "bo": jnp.zeros((H,), jnp.float32),
            "ln1_g": jnp.ones((H,), jnp.float32), "ln1_b": jnp.zeros((H,), jnp.float32),
            "wi": nrm(lk[2], (H, I), jnp.bfloat16),
            "bi": jnp.zeros((I,), jnp.float32),
            "wo2": nrm(lk[3], (I, H), jnp.bfloat16),
            "bo2": jnp.zeros((H,), jnp.float32),
            "ln2_g": jnp.ones((H,), jnp.float32), "ln2_b": jnp.zeros((H,), jnp.float32),
        })
    return params


# --------------------------------------------------------------------------
# Forward pass: BERT encoder -> pooler -> dropout(identity) -> Linear head
# --------------------------------------------------------------------------

def bert_based_uncased_forward(params, ids, mask, token_type_ids, cfg):
    B, S = ids.shape
    H = cfg["hidden"]
    nH = cfg["heads"]
    Dh = H // nH

    # ----- embeddings (gathers in XLA glue, layernorm in Pallas) -----
    pos_ids = jnp.arange(S)
    emb = (params["word_emb"][ids]
           + params["pos_emb"][pos_ids][None, :, :]
           + params["type_emb"][token_type_ids])                    # (B, S, H) f32
    # bf16 input halves the first LN's DMA; the kernel does f32 math internally.
    x = layernorm(emb.reshape(B * S, H).astype(jnp.bfloat16),
                  params["emb_ln_g"], params["emb_ln_b"])
    # TODO(synk): internal BERT dropouts + bert_drop(0.3) are identity (eval mode).

    # HF-style additive attention mask: 0 for real tokens, -10000 for padding.
    add_mask = ((1.0 - mask.astype(jnp.float32)) * -10000.0).reshape(B, 1, S)

    # ----- transformer layers (x stays (B*S, H) bf16; no head transposes) -----
    for layer in params["layers"]:
        qkv = linear(x, layer["wqkv"], layer["bqkv"])                # (M, 3H)
        ctx = attention(qkv, add_mask, B, S, nH, Dh)                 # (M, H)
        # attention-out projection + residual + LayerNorm fused in one kernel
        x = linear_residual_layernorm(ctx, layer["wo"], layer["bo"],
                                      x, layer["ln1_g"], layer["ln1_b"])

        h = linear(x, layer["wi"], layer["bi"], activation="gelu")   # (M, I)
        # FFN-down projection + residual + LayerNorm fused in one kernel
        x = linear_residual_layernorm(h, layer["wo2"], layer["bo2"],
                                      x, layer["ln2_g"], layer["ln2_b"])

    # ----- pooler: tanh(Linear(hidden[:, 0]))  (BertModel's pooled output2) -----
    hidden = x.reshape(B, S, H)
    cls = hidden[:, 0, :].astype(jnp.float32)                        # (B, H)
    # Tiny (B x H) and 4-lane-wide ops: keep in plain JAX (sub-128-lane Pallas
    # output blocks would be slower than an XLA dot).
    pooled = jnp.tanh(cls @ params["pool_w"] + params["pool_b"])
    # bert_drop = nn.Dropout(0.3) -> identity at inference
    logits = pooled @ params["out_w"] + params["out_b"]              # self.out
    return logits                                                    # (B, num_output)


# --------------------------------------------------------------------------
if __name__ == "__main__":
    cfg = dict(vocab=1000, hidden=768, heads=12, intermediate=3072, layers=2,
               max_pos=64, type_vocab=2, num_output=4)

    key = jax.random.PRNGKey(0)
    pkey, ikey = jax.random.split(key, 2)
    params = init_params(pkey, cfg)

    B, S = 2, 8
    ids = jax.random.randint(ikey, (B, S), 0, cfg["vocab"], dtype=jnp.int32)
    mask = jnp.concatenate(
        [jnp.ones((B, 6), jnp.int32), jnp.zeros((B, 2), jnp.int32)], axis=1)
    token_type_ids = jnp.zeros((B, S), jnp.int32)

    logits = bert_based_uncased_forward(params, ids, mask, token_type_ids, cfg)
    logits = jax.block_until_ready(logits)
    assert logits.shape == (B, cfg["num_output"])
    assert bool(jnp.all(jnp.isfinite(logits)))
    print("KERNEL_OK")
</pallas_src>

<mosaic_0001>
module attributes {stable_mosaic.version = 11 : i64} {
  func.func @_layernorm_kernel(%arg0: i32, %arg1: memref<16x768xbf16, #tpu.memory_space<vmem>>, %arg2: memref<1x768xf32, #tpu.memory_space<vmem>>, %arg3: memref<1x768xf32, #tpu.memory_space<vmem>>, %arg4: memref<16x768xbf16, #tpu.memory_space<vmem>>) attributes {dimension_semantics = [#tpu.dimension_semantics<parallel>], iteration_bounds = array<i64: 1>, scalar_prefetch = 0 : i64, scratch_operands = 0 : i64, tpu.core_type = #tpu.core_type<tc>, window_params = [{transform_indices = @transform_0, window_bounds = array<i64: 16, 768>}, {pipeline_mode = #tpu.pipeline_mode<synchronous>, transform_indices = @transform_1, window_bounds = array<i64: 1, 768>}, {pipeline_mode = #tpu.pipeline_mode<synchronous>, transform_indices = @transform_2, window_bounds = array<i64: 1, 768>}, {transform_indices = @transform_3, window_bounds = array<i64: 16, 768>}]} {
    %c0 = arith.constant 0 : index
    %c0_0 = arith.constant 0 : index
    %0 = vector.load %arg1[%c0, %c0_0] : memref<16x768xbf16, #tpu.memory_space<vmem>>, vector<16x768xbf16>
    %1 = arith.extf %0 : vector<16x768xbf16> to vector<16x768xf32>
    %cst = arith.constant dense<0.000000e+00> : vector<16xf32>
    %2 = vector.multi_reduction <add>, %1, %cst [1] : vector<16x768xf32> to vector<16xf32>
    %3 = vector.shape_cast %2 : vector<16xf32> to vector<16x1xf32>
    %cst_1 = arith.constant 7.680000e+02 : f32
    %4 = vector.broadcast %cst_1 : f32 to vector<16x1xf32>
    %5 = arith.divf %3, %4 : vector<16x1xf32>
    %6 = vector.broadcast %5 : vector<16x1xf32> to vector<16x768xf32>
    %7 = arith.subf %1, %6 : vector<16x768xf32>
    %8 = arith.mulf %7, %7 : vector<16x768xf32>
    %cst_2 = arith.constant dense<0.000000e+00> : vector<16xf32>
    %9 = vector.multi_reduction <add>, %8, %cst_2 [1] : vector<16x768xf32> to vector<16xf32>
    %10 = vector.shape_cast %9 : vector<16xf32> to vector<16x1xf32>
    %cst_3 = arith.constant 7.680000e+02 : f32
    %11 = vector.broadcast %cst_3 : f32 to vector<16x1xf32>
    %12 = arith.divf %10, %11 : vector<16x1xf32>
    %13 = vector.broadcast %5 : vector<16x1xf32> to vector<16x768xf32>
    %14 = arith.subf %1, %13 : vector<16x768xf32>
    %cst_4 = arith.constant 9.99999996E-13 : f32
    %15 = vector.broadcast %cst_4 : f32 to vector<16x1xf32>
    %16 = arith.addf %12, %15 : vector<16x1xf32>
    %17 = math.rsqrt %16 : vector<16x1xf32>
    %18 = vector.broadcast %17 : vector<16x1xf32> to vector<16x768xf32>
    %19 = arith.mulf %14, %18 : vector<16x768xf32>
    %c0_5 = arith.constant 0 : index
    %c0_6 = arith.constant 0 : index
    %20 = vector.load %arg2[%c0_5, %c0_6] : memref<1x768xf32, #tpu.memory_space<vmem>>, vector<1x768xf32>
    %21 = vector.broadcast %20 : vector<1x768xf32> to vector<16x768xf32>
    %22 = arith.mulf %19, %21 : vector<16x768xf32>
    %c0_7 = arith.constant 0 : index
    %c0_8 = arith.constant 0 : index
    %23 = vector.load %arg3[%c0_7, %c0_8] : memref<1x768xf32, #tpu.memory_space<vmem>>, vector<1x768xf32>
    %24 = vector.broadcast %23 : vector<1x768xf32> to vector<16x768xf32>
    %25 = arith.addf %22, %24 : vector<16x768xf32>
    %26 = arith.truncf %25 : vector<16x768xf32> to vector<16x768xbf16>
    %c0_9 = arith.constant 0 : index
    %c0_10 = arith.constant 0 : index
    %27 = vector.load %arg4[%c0_9, %c0_10] : memref<16x768xbf16, #tpu.memory_space<vmem>>, vector<16x768xbf16>
    tpu.vector_store %arg4[%c0_9, %c0_10], %26 {strides = array<i32>} : memref<16x768xbf16, #tpu.memory_space<vmem>>, vector<16x768xbf16>,
    return
  }
  func.func @transform_0(%arg0: i32) -> (i32, i32) {
    %c0_i32 = arith.constant 0 : i32
    %c0_i32_0 = arith.constant 0 : i32
    return %arg0, %c0_i32 : i32, i32
  }
  func.func @transform_1(%arg0: i32) -> (i32, i32) {
    %c0_i32 = arith.constant 0 : i32
    %c0_i32_0 = arith.constant 0 : i32
    %c0_i32_1 = arith.constant 0 : i32
    return %c0_i32, %c0_i32_0 : i32, i32
  }
  func.func @transform_2(%arg0: i32) -> (i32, i32) {
    %c0_i32 = arith.constant 0 : i32
    %c0_i32_0 = arith.constant 0 : i32
    %c0_i32_1 = arith.constant 0 : i32
    return %c0_i32, %c0_i32_0 : i32, i32
  }
  func.func @transform_3(%arg0: i32) -> (i32, i32) {
    %c0_i32 = arith.constant 0 : i32
    %c0_i32_0 = arith.constant 0 : i32
    return %arg0, %c0_i32 : i32, i32
  }
}

</mosaic_0001>

<llo_original>
// kernel: tpu_custom_call.1
$region0: #{tpu_custom_call.1}
  #allocation0 [shape = 'u32[]', space=smem, size = 0x4, offset = 0x4, fixed_abs, tag = 'smem constant byte address 0x4 - core index']
  #allocation1 [shape = 'u32[72,128]{1,0:T(1,128)}', space=vmem, size = 0x9000, scoped, tag = 'internal scratch']
  %s0 = inlined_call_operand.hbm [shape: bf16[16,768], index: 0, kind: input, shape index: {}]
  %s1 = inlined_call_operand.hbm [shape: f32[1,768], index: 1, kind: input, shape index: {}]
  %s2 = inlined_call_operand.hbm [shape: f32[1,768], index: 2, kind: input, shape index: {}]
  %s3 = inlined_call_operand.hbm [shape: bf16[16,768], index: 3, kind: output, shape index: {}]
  %s4 = sld [smem:[#allocation0]]
  $region34: #{tpu_custom_call.1} parent=0
    _
  %s6 = ssub.s32 1, %s4
  %s7 = scalar_select 0, %s6, %s4
  $region1: #{tpu_custom_call.1} parent=0
    #allocation2 [shape = 'u8[24576]{0}', space=vmem, size = 0x6000, scoped, tag = 'input window, operand 0, single buffered']
    #allocation3 [shape = 's32[1]{0}', space=sflag, size = 0x4, scoped, tag = 'scoped memory for tpu_custom_call.1']
    #allocation4 [shape = 's32[1]{0}', space=sflag, size = 0x4, scoped, tag = 'scoped memory for tpu_custom_call.1']
    #allocation5 [shape = 'u8[3072]{0}', space=vmem, size = 0xc00, scoped, tag = 'input window, operand 1, single buffered']
    #allocation6 [shape = 's32[1]{0}', space=sflag, size = 0x4, scoped, tag = 'scoped memory for tpu_custom_call.1']
    #allocation7 [shape = 'u8[3072]{0}', space=vmem, size = 0xc00, scoped, tag = 'input window, operand 2, single buffered']
    #allocation8 [shape = 'u8[24576]{0}', space=vmem, size = 0x6000, scoped, tag = 'output window, operand 0, single buffered']
    %8 = vsyncpa [#allocation3], 0
    %9 = vsyncpa [#allocation6], 0
    %10 = vsyncpa [#allocation4], 0
    // Predicated region
    $region2: #{tpu_custom_call.1} parent=1 // pred_check
      _
    $region3: #{tpu_custom_call.1} parent=1 // pred_check_branch
      %12 = sbr.rel (0) target = $region5
    $region4: #{tpu_custom_call.1} parent=1 // pred_region
      %14 = vsyncadd [#allocation3], 0
      %s15 = sshll.u32 %s0, 4
      %s16 = int_to_ptr.hbm [resolvable:$true] %s15
      %s17 = sshll.u32 [#allocation2], 4
      %s18 = int_to_ptr.vmem [resolvable:$true] %s17
      %23 = dma.hbm_to_vmem [thread:$0]  %s16, 768, %s18, [#allocation3], 384, 384, 24
    $region5: #{tpu_custom_call.1} parent=1 // pred_fallthru
      _
    // Predicated region
    $region6: #{tpu_custom_call.1} parent=1 // pred_check
      _
    $region7: #{tpu_custom_call.1} parent=1 // pred_check_branch
      %25 = sbr.rel (0) target = $region9
    $region8: #{tpu_custom_call.1} parent=1 // pred_region
      %27 = vsyncadd [#allocation6], 0
      %s29 = sshll.u32 %s1, 4
      %s30 = int_to_ptr.hbm [resolvable:$true] %s29
      %s31 = sshll.u32 [#allocation5], 4
      %s32 = int_to_ptr.vmem [resolvable:$true] %s31
      %34 = dma.hbm_to_vmem [thread:$0]  %s30, 96, %s32, [#allocation6]
    $region9: #{tpu_custom_call.1} parent=1 // pred_fallthru
      _
    // Predicated region
    $region10: #{tpu_custom_call.1} parent=1 // pred_check
      _
    $region11: #{tpu_custom_call.1} parent=1 // pred_check_branch
      %36 = sbr.rel (0) target = $region13
    $region12: #{tpu_custom_call.1} parent=1 // pred_region
      %38 = vsyncadd [#allocation6], 0
      %s40 = sshll.u32 %s2, 4
      %s41 = int_to_ptr.hbm [resolvable:$true] %s40
      %s42 = sshll.u32 [#allocation7], 4
      %s43 = int_to_ptr.vmem [resolvable:$true] %s42
      %45 = dma.hbm_to_vmem [thread:$0]  %s41, 96, %s43, [#allocation6]
    $region13: #{tpu_custom_call.1} parent=1 // pred_fallthru
      _
    // Predicated region
    $region14: #{tpu_custom_call.1} parent=1 // pred_check
      _
    $region15: #{tpu_custom_call.1} parent=1 // pred_check_branch
      %47 = sbr.rel (0) target = $region17
    $region16: #{tpu_custom_call.1} parent=1 // pred_region
      %49 = dma.done [#allocation3], 768
    $region17: #{tpu_custom_call.1} parent=1 // pred_fallthru
      _
    // Predicated region
    $region18: #{tpu_custom_call.1} parent=1 // pred_check
      _
    $region19: #{tpu_custom_call.1} parent=1 // pred_check_branch
      %51 = sbr.rel (0) target = $region21
    $region20: #{tpu_custom_call.1} parent=1 // pred_region
      %53 = dma.done [#allocation6], 96
    $region21: #{tpu_custom_call.1} parent=1 // pred_fallthru
      _
    // Predicated region
    $region22: #{tpu_custom_call.1} parent=1 // pred_check
      _
    $region23: #{tpu_custom_call.1} parent=1 // pred_check_branch
      %55 = sbr.rel (0) target = $region25
    $region24: #{tpu_custom_call.1} parent=1 // pred_region
      %57 = dma.done [#allocation6], 96
    $region25: #{tpu_custom_call.1} parent=1 // pred_fallthru
      _
    %v58 = vld [vmem:[#allocation2] sm:$0xff]
    %v59 = vld [vmem:[#allocation2 + $0x8] sm:$0xff]
    %v60 = vld [vmem:[#allocation2 + $0x10] sm:$0xff]
    %v61 = vld [vmem:[#allocation2 + $0x18] sm:$0xff]
    %v62 = vld [vmem:[#allocation2 + $0x20] sm:$0xff]
    %v63 = vld [vmem:[#allocation2 + $0x28] sm:$0xff]
    %v64 = vunpack.c.l.bf16 %v58
    %v65 = vunpack.c.h.bf16 %v58
    %v66 = vunpack.c.l.bf16 %v59
    %v67 = vunpack.c.h.bf16 %v59
    %v68 = vunpack.c.l.bf16 %v60
    %v69 = vunpack.c.h.bf16 %v60
    %v70 = vunpack.c.l.bf16 %v61
    %v71 = vunpack.c.h.bf16 %v61
    %v72 = vunpack.c.l.bf16 %v62
    %v73 = vunpack.c.h.bf16 %v62
    %v74 = vunpack.c.l.bf16 %v63
    %v75 = vunpack.c.h.bf16 %v63
    %v76 = vadd.f32 %v64, %v65
    %v77 = vadd.f32 %v76, %v66
    %v78 = vadd.f32 %v77, %v67
    %v79 = vadd.f32 %v78, %v68
    %v80 = vadd.f32 %v79, %v69
    %81 = vadd.xlane.f32.xlu0 %v80
    %v82 = vpop.xlane.xlu0 %81
    %v83 = vadd.f32 %v70, %v71
    %v84 = vadd.f32 %v83, %v72
    %v85 = vadd.f32 %v84, %v73
    %v86 = vadd.f32 %v85, %v74
    %v87 = vadd.f32 %v86, %v75
    %88 = vadd.xlane.f32.xlu0 %v87
    %v89 = vpop.xlane.xlu0 %88
    %v90 = vrcp.pop 768.0
    %v91 = vmul.f32 768.0, %v90
    %v92 = vsub.f32 1.0, %v91
    %v93 = vmul.f32 %v90, %v92
    %v94 = vadd.f32 %v90, %v93
    %vm95 = vweird.f32 %v90
    %v96 = vsel %vm95, %v90, %v94
    %v97 = vmul.f32 %v82, %v96
    %v98 = vmul.f32 %v89, %v96
    %v99 = vsub.f32 %v64, %v97
    %v100 = vsub.f32 %v65, %v97
    %v101 = vsub.f32 %v66, %v97
    %v102 = vsub.f32 %v67, %v97
    %v103 = vsub.f32 %v68, %v97
    %v104 = vsub.f32 %v69, %v97
    %v105 = vsub.f32 %v70, %v98
    %v106 = vsub.f32 %v71, %v98
    %v107 = vsub.f32 %v72, %v98
    %v108 = vsub.f32 %v73, %v98
    %v109 = vsub.f32 %v74, %v98
    %v110 = vsub.f32 %v75, %v98
    %v111 = vmul.f32 %v99, %v99
    %v112 = vmul.f32 %v100, %v100
    %v113 = vmul.f32 %v101, %v101
    %v114 = vmul.f32 %v102, %v102
    %v115 = vmul.f32 %v103, %v103
    %v116 = vmul.f32 %v104, %v104
    %v117 = vmul.f32 %v105, %v105
    %v118 = vmul.f32 %v106, %v106
    %v119 = vmul.f32 %v107, %v107
    %v120 = vmul.f32 %v108, %v108
    %v121 = vmul.f32 %v109, %v109
    %v122 = vmul.f32 %v110, %v110
    %v123 = vadd.f32 %v111, %v112
    %v124 = vadd.f32 %v123, %v113
    %v125 = vadd.f32 %v124, %v114
    %v126 = vadd.f32 %v125, %v115
    %v127 = vadd.f32 %v126, %v116
    %128 = vadd.xlane.f32.xlu0 %v127
    %v129 = vpop.xlane.xlu0 %128
    %v130 = vadd.f32 %v117, %v118
    %v131 = vadd.f32 %v130, %v119
    %v132 = vadd.f32 %v131, %v120
    %v133 = vadd.f32 %v132, %v121
    %v134 = vadd.f32 %v133, %v122
    %135 = vadd.xlane.f32.xlu0 %v134
    %v136 = vpop.xlane.xlu0 %135
    %v137 = vmul.f32 %v129, %v96
    %v138 = vmul.f32 %v136, %v96
    %v139 = vadd.f32 %v137, 1e-12
    %v140 = vadd.f32 %v138, 1e-12
    %v141 = vrsqrt.pop %v139
    %v142 = vmul.f32 %v141, %v139
    %v143 = vmul.f32 %v142, %v141
    %v144 = vmul.f32 0.5, %v143
    %v145 = vsub.f32 1.5, %v144
    %v146 = vmul.f32 %v141, %v145
    %vm147 = vweird.f32 %v139
    %vm148 = vweird.f32 %v141
    %vm149 = vmor %vm147, %vm148
    %v150 = vsel %vm149, %v141, %v146
    %v151 = vrsqrt.pop %v140
    %v152 = vmul.f32 %v151, %v140
    %v153 = vmul.f32 %v152, %v151
    %v154 = vmul.f32 0.5, %v153
    %v155 = vsub.f32 1.5, %v154
    %v156 = vmul.f32 %v151, %v155
    %vm157 = vweird.f32 %v140
    %vm158 = vweird.f32 %v151
    %vm159 = vmor %vm157, %vm158
    %v160 = vsel %vm159, %v151, %v156
    %v161 = vmul.f32 %v99, %v150
    %v162 = vmul.f32 %v100, %v150
    %v163 = vmul.f32 %v101, %v150
    %v164 = vmul.f32 %v102, %v150
    %v165 = vmul.f32 %v103, %v150
    %v166 = vmul.f32 %v104, %v150
    %v167 = vmul.f32 %v105, %v160
    %v168 = vmul.f32 %v106, %v160
    %v169 = vmul.f32 %v107, %v160
    %v170 = vmul.f32 %v108, %v160
    %v171 = vmul.f32 %v109, %v160
    %v172 = vmul.f32 %v110, %v160
    %v173 = vld [vmem:[#allocation5] sm:$0x3f]
    %v175 = vperm.slane %v173, 0
    %v176 = vperm.slane %v173, 1
    %v177 = vperm.slane %v173, 2
    %v178 = vperm.slane %v173, 3
    %v179 = vperm.slane %v173, 4
    %v180 = vperm.slane %v173, 5
    %v187 = vmul.f32 %v161, %v175
    %v188 = vmul.f32 %v162, %v176
    %v189 = vmul.f32 %v163, %v177
    %v190 = vmul.f32 %v164, %v178
    %v191 = vmul.f32 %v165, %v179
    %v192 = vmul.f32 %v166, %v180
    %v193 = vmul.f32 %v167, %v175
    %v194 = vmul.f32 %v168, %v176
    %v195 = vmul.f32 %v169, %v177
    %v196 = vmul.f32 %v170, %v178
    %v197 = vmul.f32 %v171, %v179
    %v198 = vmul.f32 %v172, %v180
    %v199 = vld [vmem:[#allocation7] sm:$0x3f]
    %v201 = vperm.slane %v199, 0
    %v202 = vperm.slane %v199, 1
    %v203 = vperm.slane %v199, 2
    %v204 = vperm.slane %v199, 3
    %v205 = vperm.slane %v199, 4
    %v206 = vperm.slane %v199, 5
    %v213 = vadd.f32 %v187, %v201
    %v214 = vadd.f32 %v188, %v202
    %v215 = vadd.f32 %v189, %v203
    %v216 = vadd.f32 %v190, %v204
    %v217 = vadd.f32 %v191, %v205
    %v218 = vadd.f32 %v192, %v206
    %v219 = vadd.f32 %v193, %v201
    %v220 = vadd.f32 %v194, %v202
    %v221 = vadd.f32 %v195, %v203
    %v222 = vadd.f32 %v196, %v204
    %v223 = vadd.f32 %v197, %v205
    %v224 = vadd.f32 %v198, %v206
    %v225 = vpack.c.bf16 %v214, %v213
    %v226 = vpack.c.bf16 %v216, %v215
    %v227 = vpack.c.bf16 %v218, %v217
    %v228 = vpack.c.bf16 %v220, %v219
    %v229 = vpack.c.bf16 %v222, %v221
    %v230 = vpack.c.bf16 %v224, %v223
    %231 = vst [vmem:[#allocation8] sm:$0xff] %v225
    %232 = vst [vmem:[#allocation8 + $0x8] sm:$0xff] %v226
    %233 = vst [vmem:[#allocation8 + $0x10] sm:$0xff] %v227
    %234 = vst [vmem:[#allocation8 + $0x18] sm:$0xff] %v228
    %235 = vst [vmem:[#allocation8 + $0x20] sm:$0xff] %v229
    %236 = vst [vmem:[#allocation8 + $0x28] sm:$0xff] %v230
    // Predicated region
    $region26: #{tpu_custom_call.1} parent=1 // pred_check
      _
    $region27: #{tpu_custom_call.1} parent=1 // pred_check_branch
      %238 = sbr.rel (0) target = $region29
    $region28: #{tpu_custom_call.1} parent=1 // pred_region
      %240 = vsyncadd [#allocation4], 0
      %s241 = sshll.u32 [#allocation8], 4
      %s242 = int_to_ptr.vmem [resolvable:$true] %s241
      %s243 = sshll.u32 %s3, 4
      %s244 = int_to_ptr.hbm [resolvable:$true] %s243
      %249 = dma.vmem_to_hbm [thread:$0]  %s242, 768, %s244, [#allocation4], 384, 384, 24
    $region29: #{tpu_custom_call.1} parent=1 // pred_fallthru
      _
    // Predicated region
    $region30: #{tpu_custom_call.1} parent=1 // pred_check
      _
    $region31: #{tpu_custom_call.1} parent=1 // pred_check_branch
      %251 = sbr.rel (0) target = $region33
    $region32: #{tpu_custom_call.1} parent=1 // pred_region
      %253 = dma.done [#allocation4], 768
    $region33: #{tpu_custom_call.1} parent=1 // pred_fallthru
      _
    %254 = vsyncpa [#allocation3], 1
    %255 = vsyncpa [#allocation6], 1
    %256 = vsyncpa [#allocation4], 1

</llo_original>
